<compile_context>
chip_gen: v7x
topology: tpu7x:2x2x1
jax: 0.10.0
libtpu: 0.0.40
codegen_flags: <defaults>
</compile_context>

<pallas_src>
import functools

import jax
import jax.numpy as jnp
from jax.experimental import pallas as pl
from jax.experimental.pallas import tpu as pltpu

EPS = 1e-5  # nn.BatchNorm2d default eps


def _edge_masks(C, H, W):
    """(9, C, H*W) f32 0/1 masks, built once in the wrapper.

    masks[t] (t = dy*3 + dx) zeroes the output positions whose 3x3 tap falls
    outside the image — exactly the lanes the in-kernel pltpu.roll wraps around.
    """
    hh = jnp.arange(H * W, dtype=jnp.int32) // W
    ww = jnp.arange(H * W, dtype=jnp.int32) % W
    rows = []
    for dy in range(3):
        for dx in range(3):
            ok = jnp.ones((H * W,), jnp.bool_)
            if dy == 0:
                ok = ok & (hh >= 1)
            if dy == 2:
                ok = ok & (hh <= H - 2)
            if dx == 0:
                ok = ok & (ww >= 1)
            if dx == 2:
                ok = ok & (ww <= W - 2)
            rows.append(ok)
    m = jnp.stack(rows, 0).astype(jnp.float32)                 # (9, HW)
    return jnp.broadcast_to(m[:, None, :], (9, C, H * W))


def _conv3x3(act_f32, w_bf16, masks, H, W):
    """3x3 'same' conv of one image as a single MXU matmul.

    act_f32 : (Cin, H*W) f32 channel-major activation.
    w_bf16  : (Cout, 9*Cin) bf16, column index = (dy*3+dx)*Cin + ci.
    masks   : (9, Cin, H*W) f32 precomputed edge masks.
    Returns (Cout, H*W) f32.
    """
    Cin, HW = act_f32.shape
    taps = []
    for dy in range(3):
        for dx in range(3):
            t = dy * 3 + dx
            s = (dy - 1) * W + (dx - 1)                        # source lane offset
            if s == 0:
                tap = act_f32
            else:
                tap = pltpu.roll(act_f32, shift=(-s) % HW, axis=1)   # XLU lane rotate
            if t != 4:                                         # center tap needs no mask
                tap = tap * masks[t]
            taps.append(tap)
    # f32 concat keeps every Cin-row slab sublane-tile aligned; a single cast to
    # bf16 right before the dot (bf16 MXU operands, f32 accumulation).
    col = jnp.concatenate(taps, axis=0).astype(jnp.bfloat16)   # (9*Cin, HW)
    return jnp.dot(w_bf16, col, preferred_element_type=jnp.float32)


def _conv1_kernel(x_ref, w_ref, m_ref, c1_ref, st_ref, *, H, W):
    """conv1 + per-block BN1 sum / sum-of-squares.  c1 is written as bf16."""
    B, C, _ = x_ref.shape
    w = w_ref[...]
    masks = m_ref[...]
    s = jnp.zeros((C, 1), jnp.float32)
    ss = jnp.zeros((C, 1), jnp.float32)
    for b in range(B):                                         # static unroll, B is small
        acc = _conv3x3(x_ref[b], w, masks, H, W)               # (C, HW) f32
        c1_ref[b] = acc.astype(jnp.bfloat16)                   # bf16 intermediate (HBM /2)
        s = s + jnp.sum(acc, axis=1, keepdims=True)
        ss = ss + jnp.sum(acc * acc, axis=1, keepdims=True)
    st_ref[0] = jnp.concatenate([s, ss], axis=1)               # (C, 2)


def _conv2_kernel(c1_ref, scale_ref, shift_ref, w_ref, m_ref, c2_ref, st_ref, *, H, W):
    """bn1 (folded scale/shift) + ReLU + conv2 + per-block BN2 statistics."""
    B, C, _ = c1_ref.shape
    w = w_ref[...]
    masks = m_ref[...]
    scale = scale_ref[...]
    shift = shift_ref[...]
    s = jnp.zeros((C, 1), jnp.float32)
    ss = jnp.zeros((C, 1), jnp.float32)
    for b in range(B):
        y1 = jnp.maximum(c1_ref[b].astype(jnp.float32) * scale + shift, 0.0)
        acc = _conv3x3(y1, w, masks, H, W)
        c2_ref[b] = acc                                        # f32 (residual precision)
        s = s + jnp.sum(acc, axis=1, keepdims=True)
        ss = ss + jnp.sum(acc * acc, axis=1, keepdims=True)
    st_ref[0] = jnp.concatenate([s, ss], axis=1)


def _bn_add_relu_kernel(c2_ref, x_ref, scale_ref, shift_ref, out_ref):
    """bn2 + residual add + ReLU (identity branch: stride=1, downsample=None)."""
    out_ref[...] = jnp.maximum(
        c2_ref[...] * scale_ref[...] + shift_ref[...] + x_ref[...], 0.0)


def _bn_scale_shift(stats, gamma, beta, count):
    """Fold batch mean/var (from per-block sum & sumsq) + affine into scale/shift."""
    # TODO(synk): single-pass E[x^2]-E[x]^2 in f32 can cancel for very large
    # N*H*W with large channel means; use a shifted / two-pass reduction if
    # tolerances drift at realistic sizes.
    tot = jnp.sum(stats, axis=0)                               # (C, 2)
    mean = tot[:, 0] / count
    var = jnp.maximum(tot[:, 1] / count - mean * mean, 0.0)    # biased (training-mode BN)
    scale = gamma.astype(jnp.float32) * jax.lax.rsqrt(var + EPS)
    shift = beta.astype(jnp.float32) - mean * scale
    return scale.reshape(-1, 1), shift.reshape(-1, 1)


def _vmem_limit_bytes():
    # v5e/v6e have 128 MiB of physical VMEM per TensorCore, v7x only 64 MiB.
    # Take roughly half as the scoped limit so double-buffered blocks never spill.
    try:
        cap = int(pltpu.get_tpu_info().vmem_capacity_bytes)
    except Exception:
        cap = 64 * 1024 * 1024                                 # conservative (v7x)
    return min(cap // 2, 96 * 1024 * 1024)


def _pick_images_per_step(N, C, HW, budget_bytes):
    """Images per grid step: amortize per-step overhead, stay in the VMEM budget,
    and keep the grid >= 2 long when possible (v7x has two TensorCores)."""
    per_image = C * HW * 4 * 16   # dbl-buffered in/out blocks + 9-tap temporaries (rough)
    B = int(max(1, min(N, budget_bytes // max(per_image, 1))))
    if N >= 2:
        B = max(1, min(B, N // 2))
    while N % B:
        B -= 1
    return B


def basic_block_forward(x_nchw, w1, g1, b1, w2, g2, b2, *, images_per_step=None):
    """BasicBlock forward (stride=1, downsample=None, training-mode BN).

    x_nchw: (N, C, H, W); w1/w2: (C, C, 3, 3) in PyTorch OIHW layout.
    """
    N, C, H, W = x_nchw.shape
    HW = H * W
    planes = w1.shape[0]
    assert planes == C, "downsample=None & stride=1 => inplanes == planes"

    # Channel-major activations (lane dim = H*W): every store is lane-dense and
    # no wrapper transposes are needed (input/output are already NCHW).
    x = x_nchw.astype(jnp.float32).reshape(N, C, HW)
    # (Cout, Cin, kh, kw) -> (Cout, (kh*3+kw)*Cin + ci), bf16 MXU operand.
    w1t = jnp.transpose(w1, (0, 2, 3, 1)).reshape(C, 9 * C).astype(jnp.bfloat16)
    w2t = jnp.transpose(w2, (0, 2, 3, 1)).reshape(C, 9 * C).astype(jnp.bfloat16)
    masks = _edge_masks(C, H, W)                               # built once, VMEM resident

    vmem_limit = _vmem_limit_bytes()
    B = images_per_step or _pick_images_per_step(N, C, HW, vmem_limit // 4)
    assert N % B == 0, "images_per_step must divide the batch"
    grid = (N // B,)

    params = pltpu.CompilerParams(
        dimension_semantics=("parallel",),                     # image blocks independent
        vmem_limit_bytes=vmem_limit)

    act_spec = pl.BlockSpec((B, C, HW), lambda n: (n, 0, 0))
    stat_spec = pl.BlockSpec((1, C, 2), lambda n: (n, 0, 0))
    w_spec = pl.BlockSpec((C, 9 * C), lambda n: (0, 0))
    mask_spec = pl.BlockSpec((9, C, HW), lambda n: (0, 0, 0))  # constant block -> resident
    vec_spec = pl.BlockSpec((C, 1), lambda n: (0, 0))

    # --- pass 1: conv1 + per-block BN1 statistics (c1 stored as bf16) ---
    c1, st1 = pl.pallas_call(
        functools.partial(_conv1_kernel, H=H, W=W),
        grid=grid,
        in_specs=[act_spec, w_spec, mask_spec],
        out_specs=(act_spec, stat_spec),
        out_shape=(jax.ShapeDtypeStruct((N, C, HW), jnp.bfloat16),
                   jax.ShapeDtypeStruct((grid[0], C, 2), jnp.float32)),
        compiler_params=params,
    )(x, w1t, masks)
    scale1, shift1 = _bn_scale_shift(st1, g1, b1, N * HW)

    # --- pass 2: bn1 + relu + conv2 + per-block BN2 statistics (c2 stays f32) ---
    c2, st2 = pl.pallas_call(
        functools.partial(_conv2_kernel, H=H, W=W),
        grid=grid,
        in_specs=[act_spec, vec_spec, vec_spec, w_spec, mask_spec],
        out_specs=(act_spec, stat_spec),
        out_shape=(jax.ShapeDtypeStruct((N, C, HW), jnp.float32),
                   jax.ShapeDtypeStruct((grid[0], C, 2), jnp.float32)),
        compiler_params=params,
    )(c1, scale1, shift1, w2t, masks)
    scale2, shift2 = _bn_scale_shift(st2, g2, b2, N * HW)

    # --- pass 3: bn2 + residual add + relu (output aliases the dead c2 buffer) ---
    out = pl.pallas_call(
        _bn_add_relu_kernel,
        grid=grid,
        in_specs=[act_spec, act_spec, vec_spec, vec_spec],
        out_specs=act_spec,
        out_shape=jax.ShapeDtypeStruct((N, C, HW), jnp.float32),
        input_output_aliases={0: 0},
        compiler_params=params,
    )(c2, x, scale2, shift2)

    return out.reshape(N, C, H, W)


def _reference_forward(x_nchw, w1, g1, b1, w2, g2, b2):
    """Pure-JAX reference of the PyTorch BasicBlock forward (training-mode BN).

    Conv operands are cast to bf16 with f32 accumulation to match the kernel's
    MXU precision, and the conv1 activation is rounded through bf16 to model the
    kernel's bf16 intermediate storage (BN1 statistics are still taken in f32,
    matching pass 1).  BN math, the residual add and ReLU are f32.
    """
    x = x_nchw.astype(jnp.float32)

    def conv(v, w):
        return jax.lax.conv_general_dilated(
            v.astype(jnp.bfloat16), w.astype(jnp.bfloat16),
            window_strides=(1, 1), padding=((1, 1), (1, 1)),
            dimension_numbers=("NCHW", "OIHW", "NCHW"),
            preferred_element_type=jnp.float32)

    def bn_stats(v):
        m = jnp.mean(v, axis=(0, 2, 3), keepdims=True)
        var = jnp.mean((v - m) ** 2, axis=(0, 2, 3), keepdims=True)
        return m, var

    def bn_apply(v, m, var, g, b):
        return ((v - m) * jax.lax.rsqrt(var + EPS) * g.reshape(1, -1, 1, 1)
                + b.reshape(1, -1, 1, 1))

    c1 = conv(x, w1)
    m1, v1 = bn_stats(c1)                                      # stats from f32 conv output
    c1_q = c1.astype(jnp.bfloat16).astype(jnp.float32)         # kernel stores c1 as bf16
    o = jnp.maximum(bn_apply(c1_q, m1, v1, g1, b1), 0.0)
    c2 = conv(o, w2)
    m2, v2 = bn_stats(c2)
    o = bn_apply(c2, m2, v2, g2, b2)
    return jnp.maximum(o + x, 0.0)


if __name__ == "__main__":
    key = jax.random.PRNGKey(0)
    k_x, k_w1, k_w2, k_g1, k_b1, k_g2, k_b2 = jax.random.split(key, 7)

    N, C, H, W = 2, 8, 16, 16                                  # inplanes == planes == 8
    x = jax.random.normal(k_x, (N, C, H, W), jnp.float32)
    w1 = 0.1 * jax.random.normal(k_w1, (C, C, 3, 3), jnp.float32)
    w2 = 0.1 * jax.random.normal(k_w2, (C, C, 3, 3), jnp.float32)
    g1 = 1.0 + 0.1 * jax.random.normal(k_g1, (C,), jnp.float32)
    b1 = 0.1 * jax.random.normal(k_b1, (C,), jnp.float32)
    g2 = 1.0 + 0.1 * jax.random.normal(k_g2, (C,), jnp.float32)
    b2 = 0.1 * jax.random.normal(k_b2, (C,), jnp.float32)

    out = jax.block_until_ready(basic_block_forward(x, w1, g1, b1, w2, g2, b2))
    ref = jax.block_until_ready(_reference_forward(x, w1, g1, b1, w2, g2, b2))

    assert out.shape == (N, C, H, W)
    err = float(jnp.max(jnp.abs(out - ref)))
    assert jnp.allclose(out, ref, rtol=2e-3, atol=2e-3), \
        f"mismatch vs reference (max abs err {err})"

    print("KERNEL_OK")
</pallas_src>

<mosaic_0001>
module attributes {stable_mosaic.version = 11 : i64} {
  func.func @_conv1_kernel(%arg0: i32, %arg1: memref<1x8x256xf32, #tpu.memory_space<vmem>>, %arg2: memref<8x72xbf16, #tpu.memory_space<vmem>>, %arg3: memref<9x8x256xf32, #tpu.memory_space<vmem>>, %arg4: memref<1x8x256xbf16, #tpu.memory_space<vmem>>, %arg5: memref<1x8x2xf32, #tpu.memory_space<vmem>>) attributes {dimension_semantics = [#tpu.dimension_semantics<parallel>], iteration_bounds = array<i64: 2>, scalar_prefetch = 0 : i64, scratch_operands = 0 : i64, tpu.core_type = #tpu.core_type<tc>, window_params = [{transform_indices = @transform_0, window_bounds = array<i64: 1, 8, 256>}, {pipeline_mode = #tpu.pipeline_mode<synchronous>, transform_indices = @transform_1, window_bounds = array<i64: 8, 72>}, {pipeline_mode = #tpu.pipeline_mode<synchronous>, transform_indices = @transform_2, window_bounds = array<i64: 9, 8, 256>}, {transform_indices = @transform_3, window_bounds = array<i64: 1, 8, 256>}, {transform_indices = @transform_4, window_bounds = array<i64: 1, 8, 2>}]} {
    %c0 = arith.constant 0 : index
    %c0_0 = arith.constant 0 : index
    %0 = vector.load %arg2[%c0, %c0_0] : memref<8x72xbf16, #tpu.memory_space<vmem>>, vector<8x72xbf16>
    %c0_1 = arith.constant 0 : index
    %c0_2 = arith.constant 0 : index
    %c0_3 = arith.constant 0 : index
    %1 = vector.load %arg3[%c0_1, %c0_2, %c0_3] : memref<9x8x256xf32, #tpu.memory_space<vmem>>, vector<9x8x256xf32>
    %cst = arith.constant 0.000000e+00 : f32
    %2 = vector.broadcast %cst : f32 to vector<8x1xf32>
    %cst_4 = arith.constant 0.000000e+00 : f32
    %3 = vector.broadcast %cst_4 : f32 to vector<8x1xf32>
    %c0_5 = arith.constant 0 : index
    %c0_6 = arith.constant 0 : index
    %c0_7 = arith.constant 0 : index
    %4 = vector.load %arg1[%c0_5, %c0_6, %c0_7] : memref<1x8x256xf32, #tpu.memory_space<vmem>>, vector<1x8x256xf32>
    %5 = vector.shape_cast %4 : vector<1x8x256xf32> to vector<8x256xf32>
    %c17_i32 = arith.constant 17 : i32
    %6 = tpu.dynamic_rotate %5 by %c17_i32 dim 1 : vector<8x256xf32>, i32 -> vector<8x256xf32>
    %7 = vector.extract_strided_slice %1 {offsets = [0, 0, 0], sizes = [1, 8, 256], strides = [1, 1, 1]} : vector<9x8x256xf32> to vector<1x8x256xf32>
    %8 = vector.shape_cast %7 : vector<1x8x256xf32> to vector<8x256xf32>
    %9 = arith.mulf %6, %8 : vector<8x256xf32>
    %c16_i32 = arith.constant 16 : i32
    %10 = tpu.dynamic_rotate %5 by %c16_i32 dim 1 : vector<8x256xf32>, i32 -> vector<8x256xf32>
    %11 = vector.extract_strided_slice %1 {offsets = [1, 0, 0], sizes = [1, 8, 256], strides = [1, 1, 1]} : vector<9x8x256xf32> to vector<1x8x256xf32>
    %12 = vector.shape_cast %11 : vector<1x8x256xf32> to vector<8x256xf32>
    %13 = arith.mulf %10, %12 : vector<8x256xf32>
    %c15_i32 = arith.constant 15 : i32
    %14 = tpu.dynamic_rotate %5 by %c15_i32 dim 1 : vector<8x256xf32>, i32 -> vector<8x256xf32>
    %15 = vector.extract_strided_slice %1 {offsets = [2, 0, 0], sizes = [1, 8, 256], strides = [1, 1, 1]} : vector<9x8x256xf32> to vector<1x8x256xf32>
    %16 = vector.shape_cast %15 : vector<1x8x256xf32> to vector<8x256xf32>
    %17 = arith.mulf %14, %16 : vector<8x256xf32>
    %c1_i32 = arith.constant 1 : i32
    %18 = tpu.dynamic_rotate %5 by %c1_i32 dim 1 : vector<8x256xf32>, i32 -> vector<8x256xf32>
    %19 = vector.extract_strided_slice %1 {offsets = [3, 0, 0], sizes = [1, 8, 256], strides = [1, 1, 1]} : vector<9x8x256xf32> to vector<1x8x256xf32>
    %20 = vector.shape_cast %19 : vector<1x8x256xf32> to vector<8x256xf32>
    %21 = arith.mulf %18, %20 : vector<8x256xf32>
    %c255_i32 = arith.constant 255 : i32
    %22 = tpu.dynamic_rotate %5 by %c255_i32 dim 1 : vector<8x256xf32>, i32 -> vector<8x256xf32>
    %23 = vector.extract_strided_slice %1 {offsets = [5, 0, 0], sizes = [1, 8, 256], strides = [1, 1, 1]} : vector<9x8x256xf32> to vector<1x8x256xf32>
    %24 = vector.shape_cast %23 : vector<1x8x256xf32> to vector<8x256xf32>
    %25 = arith.mulf %22, %24 : vector<8x256xf32>
    %c241_i32 = arith.constant 241 : i32
    %26 = tpu.dynamic_rotate %5 by %c241_i32 dim 1 : vector<8x256xf32>, i32 -> vector<8x256xf32>
    %27 = vector.extract_strided_slice %1 {offsets = [6, 0, 0], sizes = [1, 8, 256], strides = [1, 1, 1]} : vector<9x8x256xf32> to vector<1x8x256xf32>
    %28 = vector.shape_cast %27 : vector<1x8x256xf32> to vector<8x256xf32>
    %29 = arith.mulf %26, %28 : vector<8x256xf32>
    %c240_i32 = arith.constant 240 : i32
    %30 = tpu.dynamic_rotate %5 by %c240_i32 dim 1 : vector<8x256xf32>, i32 -> vector<8x256xf32>
    %31 = vector.extract_strided_slice %1 {offsets = [7, 0, 0], sizes = [1, 8, 256], strides = [1, 1, 1]} : vector<9x8x256xf32> to vector<1x8x256xf32>
    %32 = vector.shape_cast %31 : vector<1x8x256xf32> to vector<8x256xf32>
    %33 = arith.mulf %30, %32 : vector<8x256xf32>
    %c239_i32 = arith.constant 239 : i32
    %34 = tpu.dynamic_rotate %5 by %c239_i32 dim 1 : vector<8x256xf32>, i32 -> vector<8x256xf32>
    %35 = vector.extract_strided_slice %1 {offsets = [8, 0, 0], sizes = [1, 8, 256], strides = [1, 1, 1]} : vector<9x8x256xf32> to vector<1x8x256xf32>
    %36 = vector.shape_cast %35 : vector<1x8x256xf32> to vector<8x256xf32>
    %37 = arith.mulf %34, %36 : vector<8x256xf32>
    %38 = tpu.concatenate %9, %13, %17, %21, %5, %25, %29, %33, %37 in 0 : vector<8x256xf32>, vector<8x256xf32>, vector<8x256xf32>, vector<8x256xf32>, vector<8x256xf32>, vector<8x256xf32>, vector<8x256xf32>, vector<8x256xf32>, vector<8x256xf32> -> vector<72x256xf32>
    %39 = arith.truncf %38 : vector<72x256xf32> to vector<72x256xbf16>
    %cst_8 = arith.constant dense<0.000000e+00> : vector<8x256xf32>
    %40 = tpu.matmul %0, %39, %cst_8 {dimension_numbers = #tpu.dot_dimension_numbers<[1], [0], [0], [1], [0, 0, 1, 1], [], []>} : vector<8x72xbf16>, vector<72x256xbf16>, vector<8x256xf32> -> vector<8x256xf32>
    %41 = arith.truncf %40 : vector<8x256xf32> to vector<8x256xbf16>
    %c0_9 = arith.constant 0 : index
    %c0_10 = arith.constant 0 : index
    %c0_11 = arith.constant 0 : index
    %42 = vector.load %arg4[%c0_9, %c0_10, %c0_11] : memref<1x8x256xbf16, #tpu.memory_space<vmem>>, vector<1x8x256xbf16>
    %43 = vector.shape_cast %42 : vector<1x8x256xbf16> to vector<8x256xbf16>
    %44 = vector.shape_cast %41 : vector<8x256xbf16> to vector<1x8x256xbf16>
    tpu.vector_store %arg4[%c0_9, %c0_10, %c0_11], %44 {strides = array<i32>} : memref<1x8x256xbf16, #tpu.memory_space<vmem>>, vector<1x8x256xbf16>,
    %cst_12 = arith.constant dense<0.000000e+00> : vector<8xf32>
    %45 = vector.multi_reduction <add>, %40, %cst_12 [1] : vector<8x256xf32> to vector<8xf32>
    %46 = vector.shape_cast %45 : vector<8xf32> to vector<8x1xf32>
    %47 = arith.addf %2, %46 : vector<8x1xf32>
    %48 = arith.mulf %40, %40 : vector<8x256xf32>
    %cst_13 = arith.constant dense<0.000000e+00> : vector<8xf32>
    %49 = vector.multi_reduction <add>, %48, %cst_13 [1] : vector<8x256xf32> to vector<8xf32>
    %50 = vector.shape_cast %49 : vector<8xf32> to vector<8x1xf32>
    %51 = arith.addf %3, %50 : vector<8x1xf32>
    %52 = tpu.concatenate %47, %51 in 1 : vector<8x1xf32>, vector<8x1xf32> -> vector<8x2xf32>
    %c0_14 = arith.constant 0 : index
    %c0_15 = arith.constant 0 : index
    %c0_16 = arith.constant 0 : index
    %53 = vector.load %arg5[%c0_14, %c0_15, %c0_16] : memref<1x8x2xf32, #tpu.memory_space<vmem>>, vector<1x8x2xf32>
    %54 = vector.shape_cast %53 : vector<1x8x2xf32> to vector<8x2xf32>
    %55 = vector.shape_cast %52 : vector<8x2xf32> to vector<1x8x2xf32>
    tpu.vector_store %arg5[%c0_14, %c0_15, %c0_16], %55 {strides = array<i32>} : memref<1x8x2xf32, #tpu.memory_space<vmem>>, vector<1x8x2xf32>,
    return
  }
  func.func @transform_0(%arg0: i32) -> (i32, i32, i32) {
    %c0_i32 = arith.constant 0 : i32
    %c0_i32_0 = arith.constant 0 : i32
    %c0_i32_1 = arith.constant 0 : i32
    return %arg0, %c0_i32, %c0_i32_0 : i32, i32, i32
  }
  func.func @transform_1(%arg0: i32) -> (i32, i32) {
    %c0_i32 = arith.constant 0 : i32
    %c0_i32_0 = arith.constant 0 : i32
    %c0_i32_1 = arith.constant 0 : i32
    return %c0_i32, %c0_i32_0 : i32, i32
  }
  func.func @transform_2(%arg0: i32) -> (i32, i32, i32) {
    %c0_i32 = arith.constant 0 : i32
    %c0_i32_0 = arith.constant 0 : i32
    %c0_i32_1 = arith.constant 0 : i32
    %c0_i32_2 = arith.constant 0 : i32
    return %c0_i32, %c0_i32_0, %c0_i32_1 : i32, i32, i32
  }
  func.func @transform_3(%arg0: i32) -> (i32, i32, i32) {
    %c0_i32 = arith.constant 0 : i32
    %c0_i32_0 = arith.constant 0 : i32
    %c0_i32_1 = arith.constant 0 : i32
    return %arg0, %c0_i32, %c0_i32_0 : i32, i32, i32
  }
  func.func @transform_4(%arg0: i32) -> (i32, i32, i32) {
    %c0_i32 = arith.constant 0 : i32
    %c0_i32_0 = arith.constant 0 : i32
    %c0_i32_1 = arith.constant 0 : i32
    return %arg0, %c0_i32, %c0_i32_0 : i32, i32, i32
  }
}

</mosaic_0001>

<llo_original>
// kernel: tpu_custom_call.1
$region0: #{tpu_custom_call.1}
  #allocation0 [shape = 'u32[]', space=smem, size = 0x4, offset = 0x4, fixed_abs, tag = 'smem constant byte address 0x4 - core index']
  #allocation1 [shape = 'u32[144,128]{1,0:T(1,128)}', space=vmem, size = 0x12000, scoped, tag = 'internal scratch']
  %s0 = inlined_call_operand.hbm [shape: f32[2,8,256], index: 0, kind: input, shape index: {}]
  %s1 = inlined_call_operand.hbm [shape: bf16[8,72], index: 1, kind: input, shape index: {}]
  %s2 = inlined_call_operand.hbm [shape: f32[9,8,256], index: 2, kind: input, shape index: {}]
  %s3 = inlined_call_operand.hbm [shape: bf16[2,8,256], index: 3, kind: output, shape index: {0}]
  %s4 = inlined_call_operand.vmem [shape: f32[2,8,2], index: 4, kind: output, shape index: {1}]
  %5 = xla_tuple %s3, %s4
  %s6 = sld [smem:[#allocation0]]
  $region65: #{tpu_custom_call.1} parent=0
    _
  %s8 = ssub.s32 1, %s6
  %s9 = scalar_select 0, %s8, %s6
  $region1: #{tpu_custom_call.1} parent=0
    #allocation2 [shape = 'u8[16384]{0}', space=vmem, size = 0x4000, scoped, tag = 'input window, operand 0']
    #allocation3 [shape = 's32[2]{0}', space=sflag, size = 0x8, scoped, tag = 'scoped memory for tpu_custom_call.1']
    #allocation4 [shape = 's32[2]{0}', space=sflag, size = 0x8, scoped, tag = 'scoped memory for tpu_custom_call.1']
    #allocation5 [shape = 'u8[2048]{0}', space=vmem, size = 0x800, scoped, tag = 'input window, operand 1, single buffered']
    #allocation6 [shape = 's32[1]{0}', space=sflag, size = 0x4, scoped, tag = 'scoped memory for tpu_custom_call.1']
    #allocation7 [shape = 'u8[73728]{0}', space=vmem, size = 0x12000, scoped, tag = 'input window, operand 2, single buffered']
    #allocation8 [shape = 'u8[8192]{0}', space=vmem, size = 0x2000, scoped, tag = 'output window, operand 0']
    %10 = vsyncpa [#allocation3], 0
    %s11 = scalar_lea.sflag [#allocation3], 1
    %12 = vsyncpa %s11, 0
    %13 = vsyncpa [#allocation6], 0
    %14 = vsyncpa [#allocation4], 0
    %s15 = scalar_lea.sflag [#allocation4], 1
    %16 = vsyncpa %s15, 0
    loop: start=0, step=1, limit=4
    $region2: #{tpu_custom_call.1} parent=1 // loop_pre_header
      _
    $region3: #{tpu_custom_call.1} parent=1 // loop_header
      %s18 = sphi 0, %s22
      %p19 = scmp.ge.s32.totalorder %s18, 4
      %s28 = sphi 0, %s30
      %s31 = sphi 0, %s28
      %s32 = sphi 0, %s31
      %s48 = sphi 0, %s32
      %s52 = sphi 0, %s52
      %s54 = sphi 0, %s52
      %s55 = sphi 0, %s54
      %s69 = sphi 0, %s55
      %s73 = sphi 0, %s73
      %s75 = sphi 0, %s73
      %s76 = sphi 0, %s75
      %s90 = sphi 0, %s76
      %s96 = sphi 0, %s98
      %s99 = sphi 0, %s96
      %s100 = sphi 0, %s99
      %s116 = sphi 0, %s100
      %s122 = sphi 0, %s124
      %s125 = sphi 0, %s122
      %s126 = sphi 0, %s125
      %s142 = sphi 0, %s126
    $region4: #{tpu_custom_call.1} parent=1 // loop_header_branch
      %21 = sbr.rel (%p19) target = $region8
    $region5: #{tpu_custom_call.1} parent=1 // loop_body
      %s23 = ssub.s32 %s18, 1
      %s24 = ssub.s32 %s18, 2
      %s25 = sadd.s32 %s18, 1
      %s26 = ssub.s32 %s18, %s25
      %p27 = scmp.eq.s32.totalorder %s26, 0
      %s29 = sadd.s32 %s28, 1
      %s30 = scalar_select %p27, %s28, %s29
      %p33 = pneg %p27
      %p34 = scmp.eq.s32.totalorder %s18, 1
      %p35 = por %p33, %p34
      %p36 = scmp.ne.s32.totalorder %s28, %s31
      %p37 = scmp.eq.s32.totalorder %s18, 0
      %p38 = por %p36, %p37
      %p39 = scmp.ne.s32.totalorder %s28, %s31
      %p40 = scmp.eq.s32.totalorder %s23, 1
      %p41 = por %p39, %p40
      %p42 = scmp.ne.s32.totalorder %s31, %s32
      %p43 = scmp.eq.s32.totalorder %s23, 0
      %p44 = por %p42, %p43
      %p45 = scmp.ne.s32.totalorder %s31, %s32
      %p46 = scmp.eq.s32.totalorder %s24, 1
      %p47 = por %p45, %p46
      %p49 = scmp.ne.s32.totalorder %s32, %s48
      %p50 = scmp.eq.s32.totalorder %s24, 0
      %p51 = por %p49, %p50
      %s53 = sadd.s32 %s52, 1
      %p56 = scmp.eq.s32.totalorder %s18, 1
      %p57 = scmp.ne.s32.totalorder %s52, %s54
      %p58 = scmp.eq.s32.totalorder %s18, 0
      %p59 = por %p57, %p58
      %p60 = scmp.ne.s32.totalorder %s52, %s54
      %p61 = scmp.eq.s32.totalorder %s23, 1
      %p62 = por %p60, %p61
      %p63 = scmp.ne.s32.totalorder %s54, %s55
      %p64 = scmp.eq.s32.totalorder %s23, 0
      %p65 = por %p63, %p64
      %p66 = scmp.ne.s32.totalorder %s54, %s55
      %p67 = scmp.eq.s32.totalorder %s24, 1
      %p68 = por %p66, %p67
      %p70 = scmp.ne.s32.totalorder %s55, %s69
      %p71 = scmp.eq.s32.totalorder %s24, 0
      %p72 = por %p70, %p71
      %s74 = sadd.s32 %s73, 1
      %p77 = scmp.eq.s32.totalorder %s18, 1
      %p78 = scmp.ne.s32.totalorder %s73, %s75
      %p79 = scmp.eq.s32.totalorder %s18, 0
      %p80 = por %p78, %p79
      %p81 = scmp.ne.s32.totalorder %s73, %s75
      %p82 = scmp.eq.s32.totalorder %s23, 1
      %p83 = por %p81, %p82
      %p84 = scmp.ne.s32.totalorder %s75, %s76
      %p85 = scmp.eq.s32.totalorder %s23, 0
      %p86 = por %p84, %p85
      %p87 = scmp.ne.s32.totalorder %s75, %s76
      %p88 = scmp.eq.s32.totalorder %s24, 1
      %p89 = por %p87, %p88
      %p91 = scmp.ne.s32.totalorder %s76, %s90
      %p92 = scmp.eq.s32.totalorder %s24, 0
      %p93 = por %p91, %p92
      %s94 = ssub.s32 %s18, %s25
      %p95 = scmp.eq.s32.totalorder %s94, 0
      %s97 = sadd.s32 %s96, 1
      %s98 = scalar_select %p95, %s96, %s97
      %p101 = pneg %p95
      %p102 = scmp.eq.s32.totalorder %s18, 1
      %p103 = por %p101, %p102
      %p104 = scmp.ne.s32.totalorder %s96, %s99
      %p105 = scmp.eq.s32.totalorder %s18, 0
      %p106 = por %p104, %p105
      %p107 = scmp.ne.s32.totalorder %s96, %s99
      %p108 = scmp.eq.s32.totalorder %s23, 1
      %p109 = por %p107, %p108
      %p110 = scmp.ne.s32.totalorder %s99, %s100
      %p111 = scmp.eq.s32.totalorder %s23, 0
      %p112 = por %p110, %p111
      %p113 = scmp.ne.s32.totalorder %s99, %s100
      %p114 = scmp.eq.s32.totalorder %s24, 1
      %p115 = por %p113, %p114
      %p117 = scmp.ne.s32.totalorder %s100, %s116
      %p118 = scmp.eq.s32.totalorder %s24, 0
      %p119 = por %p117, %p118
      %s120 = ssub.s32 %s18, %s25
      %p121 = scmp.eq.s32.totalorder %s120, 0
      %s123 = sadd.s32 %s122, 1
      %s124 = scalar_select %p121, %s122, %s123
      %p127 = pneg %p121
      %p128 = scmp.eq.s32.totalorder %s18, 1
      %p129 = por %p127, %p128
      %p130 = scmp.ne.s32.totalorder %s122, %s125
      %p131 = scmp.eq.s32.totalorder %s18, 0
      %p132 = por %p130, %p131
      %p133 = scmp.ne.s32.totalorder %s122, %s125
      %p134 = scmp.eq.s32.totalorder %s23, 1
      %p135 = por %p133, %p134
      %p136 = scmp.ne.s32.totalorder %s125, %s126
      %p137 = scmp.eq.s32.totalorder %s23, 0
      %p138 = por %p136, %p137
      %p139 = scmp.ne.s32.totalorder %s125, %s126
      %p140 = scmp.eq.s32.totalorder %s24, 1
      %p141 = por %p139, %p140
      %p143 = scmp.ne.s32.totalorder %s126, %s142
      %p144 = scmp.eq.s32.totalorder %s24, 0
      %p145 = por %p143, %p144
      %p146 = scmp.le.s32.totalorder 1, %s18
      %p147 = scmp.lt.s32.totalorder %s18, 3
      %p148 = pnand %p146, %p147
      %p149 = pneg %p148
      // Predicated region
      $region9: #{tpu_custom_call.1} parent=5 // pred_check
        _
      $region10: #{tpu_custom_call.1} parent=5 // pred_check_branch
        %151 = sbr.rel (%p148) target = $region12
      $region11: #{tpu_custom_call.1} parent=5 // pred_region
        %s152 = ssub.s32 %s18, 1
        // Predicated region
        $region13: #{tpu_custom_call.1} parent=11 // pred_check
          %p153 = pneg %p65
        $region14: #{tpu_custom_call.1} parent=11 // pred_check_branch
          %155 = sbr.rel (%p153) target = $region16
        $region15: #{tpu_custom_call.1} parent=11 // pred_region
          %s157 = ssub.s32 64, 64
          %158 = vsyncadd [#allocation6], %s157
          %s160 = sshll.u32 [#allocation5], 4
          %s161 = int_to_ptr.vmem [resolvable:$true] %s160
          %163 = dma.hbm_to_vmem [thread:$0]  %s1, 64, %s161, [#allocation6]
        $region16: #{tpu_custom_call.1} parent=11 // pred_fallthru
          _
        // Predicated region
        $region17: #{tpu_custom_call.1} parent=11 // pred_check
          %p164 = pneg %p86
        $region18: #{tpu_custom_call.1} parent=11 // pred_check_branch
          %166 = sbr.rel (%p164) target = $region20
        $region19: #{tpu_custom_call.1} parent=11 // pred_region
          %s168 = ssub.s32 2304, 2304
          %169 = vsyncadd [#allocation6], %s168
          %s170 = sshll.u32 [#allocation7], 4
          %s171 = int_to_ptr.vmem [resolvable:$true] %s170
          %176 = dma.hbm_to_vmem [thread:$0]  %s2, 2304, %s171, [#allocation6], 256, 256, 16
        $region20: #{tpu_custom_call.1} parent=11 // pred_fallthru
          _
      $region12: #{tpu_custom_call.1} parent=5 // pred_fallthru
        _
      %p177 = scmp.lt.s32.totalorder %s18, 2
      // Predicated region
      $region21: #{tpu_custom_call.1} parent=5 // pred_check
        %p178 = pneg %p177
      $region22: #{tpu_custom_call.1} parent=5 // pred_check_branch
        %180 = sbr.rel (%p178) target = $region24
      $region23: #{tpu_custom_call.1} parent=5 // pred_region
        // Predicated region
        $region25: #{tpu_custom_call.1} parent=23 // pred_check
          %p181 = pneg %p38
        $region26: #{tpu_custom_call.1} parent=23 // pred_check_branch
          %183 = sbr.rel (%p181) target = $region28
        $region27: #{tpu_custom_call.1} parent=23 // pred_region
          %s184 = sand.u32 %s28, 1
          %s185 = scalar_lea.sflag [#allocation3], %s184
          %s186 = sand.u32 %s28, 1
          %s187 = smul.addr %s186, 16
          %s188 = scalar_lea.vmem [#allocation2], %s187
          %s190 = ssub.s32 256, 256
          %191 = vsyncadd %s185, %s190
          %s192 = smul.addr %s18, 2
          %s193 = smul.addr %s192, 128
          %s194 = scalar_lea.hbm %s0, %s193
          %s196 = sshll.u32 %s188, 4
          %s197 = int_to_ptr.vmem [resolvable:$true] %s196
          %199 = dma.hbm_to_vmem [thread:$0]  %s194, 256, %s197, %s185
        $region28: #{tpu_custom_call.1} parent=23 // pred_fallthru
          _
      $region24: #{tpu_custom_call.1} parent=5 // pred_fallthru
        _
      %p200 = scmp.le.s32.totalorder 1, %s18
      %p201 = scmp.lt.s32.totalorder %s18, 3
      %p202 = pnand %p200, %p201
      %p203 = pneg %p202
      // Predicated region
      $region29: #{tpu_custom_call.1} parent=5 // pred_check
        _
      $region30: #{tpu_custom_call.1} parent=5 // pred_check_branch
        %205 = sbr.rel (%p202) target = $region32
      $region31: #{tpu_custom_call.1} parent=5 // pred_region
        %s206 = ssub.s32 %s18, 1
        %s207 = sand.u32 %s31, 1
        %s208 = scalar_lea.sflag [#allocation3], %s207
        %s209 = sand.u32 %s31, 1
        %s210 = smul.addr %s209, 16
        %s211 = scalar_lea.vmem [#allocation2], %s210
        // Predicated region
        $region33: #{tpu_custom_call.1} parent=31 // pred_check
          %p212 = pneg %p44
        $region34: #{tpu_custom_call.1} parent=31 // pred_check_branch
          %214 = sbr.rel (%p212) target = $region36
        $region35: #{tpu_custom_call.1} parent=31 // pred_region
          %215 = dma.done %s208, 256
        $region36: #{tpu_custom_call.1} parent=31 // pred_fallthru
          _
        // Predicated region
        $region37: #{tpu_custom_call.1} parent=31 // pred_check
          %p216 = pneg %p65
        $region38: #{tpu_custom_call.1} parent=31 // pred_check_branch
          %218 = sbr.rel (%p216) target = $region40
        $region39: #{tpu_custom_call.1} parent=31 // pred_region
          %219 = dma.done [#allocation6], 64
        $region40: #{tpu_custom_call.1} parent=31 // pred_fallthru
          _
        // Predicated region
        $region41: #{tpu_custom_call.1} parent=31 // pred_check
          %p220 = pneg %p86
        $region42: #{tpu_custom_call.1} parent=31 // pred_check_branch
          %222 = sbr.rel (%p220) target = $region44
        $region43: #{tpu_custom_call.1} parent=31 // pred_region
          %223 = dma.done [#allocation6], 2304
        $region44: #{tpu_custom_call.1} parent=31 // pred_fallthru
          _
        %s224 = sand.u32 %s31, 1
        %s225 = scalar_lea.sflag [#allocation3], %s224
        %s226 = sand.u32 %s31, 1
        %s227 = smul.addr %s226, 16
        %s228 = scalar_lea.vmem [#allocation2], %s227
        %p229 = pneg %p44
        %p230 = pneg %p41
        %p231 = pneg %p65
        %p232 = pneg %p62
        %p233 = pneg %p86
        %p234 = pneg %p83
        %p235 = pneg %p112
        %p236 = pneg %p109
        %s237 = sand.u32 %s99, 1
        %s238 = scalar_lea.sflag [#allocation4], %s237
        %s239 = sand.u32 %s99, 1
        %s240 = smul.addr %s239, 8
        %s241 = scalar_lea.vmem [#allocation8], %s240
        %p242 = pneg %p138
        %p243 = pneg %p135
        %p244 = scmp.lt.s32.totalorder %s23, 1
        %s245 = scalar_select %p244, %s23, 1
        %s246 = smul.addr %s245, 8
        %s247 = scalar_lea.vmem %s4, %s246
        %p248 = scmp.lt.s32.totalorder %s23, 1
        %s249 = scalar_select %p248, %s23, 1
        %s250 = smul.addr %s249, 8
        %s251 = scalar_lea.vmem %s4, %s250
        %v253 = vld [vmem:[#allocation5] sm:$0xf]
        %v254 = vld [vmem:[#allocation7] sm:$0xff]
        %v255 = vld [vmem:[#allocation7 + $0x8] sm:$0xff]
        %v256 = vld [vmem:[#allocation7 + $0x10] sm:$0xff]
        %v257 = vld [vmem:[#allocation7 + $0x18] sm:$0xff]
        %v258 = vld [vmem:[#allocation7 + $0x20] sm:$0xff]
        %v259 = vld [vmem:[#allocation7 + $0x28] sm:$0xff]
        %v260 = vld [vmem:[#allocation7 + $0x30] sm:$0xff]
        %v261 = vld [vmem:[#allocation7 + $0x38] sm:$0xff]
        %v262 = vld [vmem:[#allocation7 + $0x50] sm:$0xff]
        %v263 = vld [vmem:[#allocation7 + $0x58] sm:$0xff]
        %v264 = vld [vmem:[#allocation7 + $0x60] sm:$0xff]
        %v265 = vld [vmem:[#allocation7 + $0x68] sm:$0xff]
        %v266 = vld [vmem:[#allocation7 + $0x70] sm:$0xff]
        %v267 = vld [vmem:[#allocation7 + $0x78] sm:$0xff]
        %v268 = vld [vmem:[#allocation7 + $0x80] sm:$0xff]
        %v269 = vld [vmem:[#allocation7 + $0x88] sm:$0xff]
        %v270 = vld [vmem:[%s211] sm:$0xff]
        %v271 = vld [vmem:[%s211 + $0x8] sm:$0xff]
        %272 = vrot.lane.b32.xlu0 %v270, 17
        %v273 = vpop.permute.xlu0 %272
        %274 = vrot.lane.b32.xlu0 %v271, 17
        %v275 = vpop.permute.xlu0 %274
        %v276 = vlaneseq
        %v277 = vand.u32 %v276, 127
        %vm278 = vcmp.lt.s32.totalorder %v277, 17
        %v279 = vsel %vm278, %v273, %v275
        %v280 = vsel %vm278, %v275, %v273
        %v281 = vmul.f32 %v280, %v254
        %v282 = vmul.f32 %v279, %v255
        %283 = vrot.lane.b32.xlu0 %v270, 16
        %v284 = vpop.permute.xlu0 %283
        %285 = vrot.lane.b32.xlu0 %v271, 16
        %v286 = vpop.permute.xlu0 %285
        %vm287 = vcmp.lt.s32.totalorder %v277, 16
        %v288 = vsel %vm287, %v284, %v286
        %v289 = vsel %vm287, %v286, %v284
        %v290 = vmul.f32 %v289, %v256
        %v291 = vmul.f32 %v288, %v257
        %292 = vrot.lane.b32.xlu0 %v270, 15
        %v293 = vpop.permute.xlu0 %292
        %294 = vrot.lane.b32.xlu0 %v271, 15
        %v295 = vpop.permute.xlu0 %294
        %vm296 = vcmp.lt.s32.totalorder %v277, 15
        %v297 = vsel %vm296, %v293, %v295
        %v298 = vsel %vm296, %v295, %v293
        %v299 = vmul.f32 %v298, %v258
        %v300 = vmul.f32 %v297, %v259
        %301 = vrot.lane.b32.xlu0 %v270, 1
        %v302 = vpop.permute.xlu0 %301
        %303 = vrot.lane.b32.xlu0 %v271, 1
        %v304 = vpop.permute.xlu0 %303
        %vm305 = vcmp.lt.s32.totalorder %v277, 1
        %v306 = vsel %vm305, %v302, %v304
        %v307 = vsel %vm305, %v304, %v302
        %v308 = vmul.f32 %v307, %v260
        %v309 = vmul.f32 %v306, %v261
        %310 = vrot.lane.b32.xlu0 %v270, 127
        %v311 = vpop.permute.xlu0 %310
        %312 = vrot.lane.b32.xlu0 %v271, 127
        %v313 = vpop.permute.xlu0 %312
        %vm314 = vcmp.lt.s32.totalorder %v277, 127
        %v315 = vsel %vm314, %v311, %v313
        %v316 = vsel %vm314, %v313, %v311
        %v317 = vmul.f32 %v315, %v262
        %v318 = vmul.f32 %v316, %v263
        %319 = vrot.lane.b32.xlu0 %v270, 113
        %v320 = vpop.permute.xlu0 %319
        %321 = vrot.lane.b32.xlu0 %v271, 113
        %v322 = vpop.permute.xlu0 %321
        %vm323 = vcmp.lt.s32.totalorder %v277, 113
        %v324 = vsel %vm323, %v320, %v322
        %v325 = vsel %vm323, %v322, %v320
        %v326 = vmul.f32 %v324, %v264
        %v327 = vmul.f32 %v325, %v265
        %328 = vrot.lane.b32.xlu0 %v270, 112
        %v329 = vpop.permute.xlu0 %328
        %330 = vrot.lane.b32.xlu0 %v271, 112
        %v331 = vpop.permute.xlu0 %330
        %vm332 = vcmp.lt.s32.totalorder %v277, 112
        %v333 = vsel %vm332, %v329, %v331
        %v334 = vsel %vm332, %v331, %v329
        %v335 = vmul.f32 %v333, %v266
        %v336 = vmul.f32 %v334, %v267
        %337 = vrot.lane.b32.xlu0 %v270, 111
        %v338 = vpop.permute.xlu0 %337
        %339 = vrot.lane.b32.xlu0 %v271, 111
        %v340 = vpop.permute.xlu0 %339
        %vm341 = vcmp.lt.s32.totalorder %v277, 111
        %v342 = vsel %vm341, %v338, %v340
        %v343 = vsel %vm341, %v340, %v338
        %v344 = vmul.f32 %v342, %v268
        %v345 = vmul.f32 %v343, %v269
        %v346 = vpack.c.bf16 %v290, %v281
        %v347 = vpack.c.bf16 %v291, %v282
        %v348 = vpack.c.bf16 %v308, %v299
        %v349 = vpack.c.bf16 %v309, %v300
        %v350 = vpack.c.bf16 %v317, %v270
        %v351 = vpack.c.bf16 %v318, %v271
        %v352 = vpack.c.bf16 %v335, %v326
        %v353 = vpack.c.bf16 %v336, %v327
        %v354 = vpack.c.bf16 %v344, %v344
        %v355 = vpack.c.bf16 %v345, %v345
        %vm356 = vcmask 588800
        %v358 = vsel %vm356, %v253, 0
        %vm360 = vcmask 1043456
        %v362 = vsel %vm360, %v354, 0
        %v365 = vsel %vm360, %v355, 0
        %367 = vmatprep.subr.bf16.mxu0 %v347
        %368 = vmatpush1.bf16.msra.mxu0 %v346
        %369 = vmatprep.subr.bf16.mxu0 %v349
        %370 = vmatpush1.bf16.msra.mxu0 %v348
        %371 = vmatprep.subr.bf16.mxu0 %v351
        %372 = vmatpush1.bf16.msra.mxu0 %v350
        %373 = vmatprep.subr.bf16.mxu0 %v353
        %374 = vmatpush1.bf16.msra.mxu0 %v352
        %375 = vmatprep.subr.bf16.mxu0 %v365
        %376 = vmatpush1.bf16.msra.mxu0 %v362
        %377 = vmatprep.subr.bf16.mxu0 0
        %378 = vmatpush1.bf16.msra.mxu0 0
        %379 = vmatprep.subr.bf16.mxu0 0
        %380 = vmatpush1.bf16.msra.mxu0 0
        %381 = vmatprep.subr.bf16.mxu0 0
        %382 = vmatpush1.bf16.msra.mxu0 0
        %383 = vmatprep.subr.bf16.mxu0 0
        %384 = vmatpush1.bf16.msra.mxu0 0
        %385 = vmatprep.subr.bf16.mxu0 0
        %386 = vmatpush1.bf16.msra.mxu0 0
        %387 = vmatprep.subr.bf16.mxu0 0
        %388 = vmatpush1.bf16.msra.mxu0 0
        %389 = vmatprep.subr.bf16.mxu0 0
        %390 = vmatpush1.bf16.msra.mxu0 0
        %391 = vmatprep.subr.bf16.mxu0 0
        %392 = vmatpush1.bf16.msra.mxu0 0
        %393 = vmatprep.subr.bf16.mxu0 0
        %394 = vmatpush1.bf16.msra.mxu0 0
        %395 = vmatprep.subr.bf16.mxu0 0
        %396 = vmatpush1.bf16.msra.mxu0 0
        %397 = vmatprep.subr.bf16.mxu0 0
        %398 = vmatpush1.bf16.msra.mxu0 0
        %399 = vmatprep.mubr.bf16.mxu0 0
        %400 = vmatmul.mubr.bf16.gmra.mrb[0].mxu0 %v358
        %v401 = vpop.f32.mrb[0].mxu0
        %v402 = vadd.f32 0.0, %v401
        %v403 = vpop.f32.mrb[0].mxu0
        %v404 = vadd.f32 0.0, %v403
        %v405 = vpop.f32.mrb[0].mxu0
        %v406 = vpop.f32.mrb[0].mxu0
        %407 = vdwg.mxu0
        %v408 = vpack.c.bf16 %v402, %v402
        %v409 = vpack.c.bf16 %v404, %v404
        %v412 = vunpack.c.l.b16 %v408
        %v413 = vunpack.c.l.b16 %v409
        %v414 = vpack.c.b16 %v413, %v412
        %416 = vst [vmem:[%s241] sm:$0xff] %v414
        %v417 = vadd.f32 %v402, %v404
        %418 = vadd.xlane.f32.xlu0 %v417
        %v419 = vpop.xlane.xlu0 %418
        %v420 = vadd.f32 %v419, 0.0
        %v421 = vmul.f32 %v402, %v402
        %v422 = vmul.f32 %v404, %v404
        %v423 = vadd.f32 %v421, %v422
        %424 = vadd.xlane.f32.xlu0 %v423
        %v425 = vpop.xlane.xlu0 %424
        %v426 = vadd.f32 %v425, 0.0
        %vm427 = vcmask 7168
        %v428 = vsel %vm427, %v420, %v426
        %vm429 = vcmask 15360
        %430 = vst.msk [vmem:[%s251] sm:$0xff] %vm429, %v428
        %s431 = sand.u32 %s99, 1
        %s432 = scalar_lea.sflag [#allocation4], %s431
        %s433 = sand.u32 %s99, 1
        %s434 = smul.addr %s433, 8
        %s435 = scalar_lea.vmem [#allocation8], %s434
        %p436 = scmp.lt.s32.totalorder %s23, 1
        %s437 = scalar_select %p436, %s23, 1
        %s438 = smul.addr %s437, 8
        %s439 = scalar_lea.vmem %s4, %s438
        // Predicated region
        $region45: #{tpu_custom_call.1} parent=31 // pred_check
          %p440 = pneg %p109
        $region46: #{tpu_custom_call.1} parent=31 // pred_check_branch
          %442 = sbr.rel (%p440) target = $region48
        $region47: #{tpu_custom_call.1} parent=31 // pred_region
          %s444 = ssub.s32 128, 128
          %445 = vsyncadd %s432, %s444
          %s446 = smul.addr %s23, 2
          %s447 = smul.addr %s446, 64
          %s448 = scalar_lea.hbm %s3, %s447
          %s450 = sshll.u32 %s435, 4
          %s451 = int_to_ptr.vmem [resolvable:$true] %s450
          %453 = dma.vmem_to_hbm [thread:$0]  %s451, 128, %s448, %s432
        $region48: #{tpu_custom_call.1} parent=31 // pred_fallthru
          _
        // Predicated region
        $region49: #{tpu_custom_call.1} parent=31 // pred_check
          %p454 = pneg %p135
        $region50: #{tpu_custom_call.1} parent=31 // pred_check_branch
          %456 = sbr.rel (%p454) target = $region52
        $region51: #{tpu_custom_call.1} parent=31 // pred_region
          _
        $region52: #{tpu_custom_call.1} parent=31 // pred_fallthru
          _
      $region32: #{tpu_custom_call.1} parent=5 // pred_fallthru
        _
      %p457 = scmp.le.s32.totalorder 2, %s18
      // Predicated region
      $region53: #{tpu_custom_call.1} parent=5 // pred_check
        %p458 = pneg %p457
      $region54: #{tpu_custom_call.1} parent=5 // pred_check_branch
        %460 = sbr.rel (%p458) target = $region56
      $region55: #{tpu_custom_call.1} parent=5 // pred_region
        %s461 = ssub.s32 %s18, 2
        // Predicated region
        $region57: #{tpu_custom_call.1} parent=55 // pred_check
          %p462 = pneg %p115
        $region58: #{tpu_custom_call.1} parent=55 // pred_check_branch
          %464 = sbr.rel (%p462) target = $region60
        $region59: #{tpu_custom_call.1} parent=55 // pred_region
          %s465 = sand.u32 %s100, 1
          %s466 = scalar_lea.sflag [#allocation4], %s465
          %s467 = sand.u32 %s100, 1
          %s468 = smul.addr %s467, 8
          %s469 = scalar_lea.vmem [#allocation8], %s468
          %470 = dma.done %s466, 128
        $region60: #{tpu_custom_call.1} parent=55 // pred_fallthru
          _
        // Predicated region
        $region61: #{tpu_custom_call.1} parent=55 // pred_check
          %p471 = pneg %p141
        $region62: #{tpu_custom_call.1} parent=55 // pred_check_branch
          %473 = sbr.rel (%p471) target = $region64
        $region63: #{tpu_custom_call.1} parent=55 // pred_region
          %p474 = scmp.lt.s32.totalorder %s24, 1
          %s475 = scalar_select %p474, %s24, 1
          %s476 = smul.addr %s475, 8
          %s477 = scalar_lea.vmem %s4, %s476
        $region64: #{tpu_custom_call.1} parent=55 // pred_fallthru
          _
      $region56: #{tpu_custom_call.1} parent=5 // pred_fallthru
        _
    $region6: #{tpu_custom_call.1} parent=1 // loop_footer
      %s22 = sadd.s32 1, %s18
    $region7: #{tpu_custom_call.1} parent=1 // loop_footer_branch
      %17 = sbr.rel target = $region3
    $region8: #{tpu_custom_call.1} parent=1 // loop_exit
      _
    %478 = vsyncpa [#allocation3], 1
    %s479 = scalar_lea.sflag [#allocation3], 1
    %480 = vsyncpa %s479, 1
    %481 = vsyncpa [#allocation6], 1
    %482 = vsyncpa [#allocation4], 1
    %s483 = scalar_lea.sflag [#allocation4], 1
    %484 = vsyncpa %s483, 1

</llo_original>
